<compile_context>
chip_gen: v5e
topology: v5e:2x2
jax: 0.10.0
libtpu: 0.0.40
codegen_flags: <defaults>
</compile_context>

<pallas_src>
import functools

import jax
import jax.numpy as jnp
from jax.experimental import pallas as pl
from jax.experimental.pallas import tpu as pltpu

_LANES = 128
_MAX_TILE_ROWS = 8192   # 8192 * 128 * 4B = 4 MiB f32 per input per pipeline buffer


def _sublane_multiple(*dtypes):
    """Block sublane-dim multiple required by the narrowest streamed dtype."""
    mult = 8
    for dt in dtypes:
        itemsize = jnp.dtype(dt).itemsize
        mult = max(mult, 8 * max(1, 4 // itemsize))   # f32->8, bf16->16, int8/bool->32
    return mult


def _soft_dice_sums_kernel(m1_ref, m2_ref, out_ref,
                           inter_acc, s1_acc, s2_acc,
                           *, rows_total, tile_rows, need_mask):
    """Accumulate per-batch lane-wise partial sums.

    Per grid step (batch dim squeezed out of the blocks):
      m1_ref, m2_ref : (tile_rows, 128)  logits / targets, native dtype
      out_ref        : (3, 128)          rows = [inter, sum(probs), sum(targets)]
      *_acc          : (1, 128) f32 VMEM scratch, resident across the row-tile axis
    """
    k = pl.program_id(1)
    last = pl.num_programs(1) - 1

    @pl.when(k == 0)
    def _():
        inter_acc[...] = jnp.zeros_like(inter_acc)
        s1_acc[...] = jnp.zeros_like(s1_acc)
        s2_acc[...] = jnp.zeros_like(s2_acc)

    logits = m1_ref[...].astype(jnp.float32)
    targets = m2_ref[...].astype(jnp.float32)
    # sigmoid(x) = 1 / (1 + exp(-x)): exp and the approximate reciprocal both
    # run on the EUP slot, keeping the VALU slot free for the accumulation adds.
    probs = pl.reciprocal(1.0 + jnp.exp(-logits), approx=True)

    def _accumulate(p, t):
        # Sublane (axis 0) reductions into lane-wide accumulators; no
        # cross-lane reduction in the hot loop.
        inter_acc[...] += jnp.sum(p * t, axis=0, keepdims=True)
        s1_acc[...] += jnp.sum(p, axis=0, keepdims=True)
        s2_acc[...] += jnp.sum(t, axis=0, keepdims=True)

    if need_mask:
        # Masking ops only on the (single) ragged last tile; unmasked path for
        # every other grid step.
        @pl.when(k != last)
        def _():
            _accumulate(probs, targets)

        @pl.when(k == last)
        def _():
            row_ids = jax.lax.broadcasted_iota(jnp.int32, (tile_rows, _LANES), 0)
            valid = (k * tile_rows + row_ids) < rows_total
            _accumulate(jnp.where(valid, probs, 0.0),
                        jnp.where(valid, targets, 0.0))
    else:
        _accumulate(probs, targets)

    @pl.when(k == last)
    def _():
        out_ref[0:1, :] = inter_acc[...]
        out_ref[1:2, :] = s1_acc[...]
        out_ref[2:3, :] = s2_acc[...]


def soft_dice_loss(logits, targets, smooth=1.0):
    """Pallas SoftDiceLoss forward.  logits/targets: (N, ...) -> scalar.

    Inputs are streamed in their native dtypes (pass int8/bool segmentation
    masks directly to halve/quarter the target-side HBM traffic); upcast to
    f32 happens inside the kernel.
    """
    num = logits.shape[0]
    m1 = logits.reshape(num, -1)      # contiguous reshape, no HBM copy
    m2 = targets.reshape(num, -1)
    d = m1.shape[1]

    # Sublane-dense view (N, rows, 128).  Conv feature maps normally have
    # D % 128 == 0 (copy-free path).  Fallback: pad the <128-element remainder
    # (this materializes a copy of both arrays; large finite negative so
    # sigmoid underflows to ~0, targets padded with 0).
    rem = d % _LANES
    if rem != 0:
        pad = _LANES - rem
        m1 = jnp.pad(m1, ((0, 0), (0, pad)), constant_values=-30.0)
        m2 = jnp.pad(m2, ((0, 0), (0, pad)), constant_values=0)
    rows = m1.shape[1] // _LANES
    m1 = m1.reshape(num, rows, _LANES)
    m2 = m2.reshape(num, rows, _LANES)

    # Balanced row tiles (near-equal sizes); dtype-aware sublane rounding.
    sub = _sublane_multiple(m1.dtype, m2.dtype)
    num_row_tiles = max(1, pl.cdiv(rows, _MAX_TILE_ROWS))
    if num_row_tiles == 1:
        tile_rows = rows                         # full extent: always legal, no mask
    else:
        tile_rows = min(_MAX_TILE_ROWS,
                        ((pl.cdiv(rows, num_row_tiles) + sub - 1) // sub) * sub)
        num_row_tiles = pl.cdiv(rows, tile_rows)
    need_mask = (rows % tile_rows) != 0

    kernel = functools.partial(_soft_dice_sums_kernel,
                               rows_total=rows, tile_rows=tile_rows,
                               need_mask=need_mask)

    bytes_in = m1.size * m1.dtype.itemsize + m2.size * m2.dtype.itemsize
    cost = pl.CostEstimate(
        flops=5 * num * rows * _LANES,
        transcendentals=num * rows * _LANES,
        bytes_accessed=int(bytes_in) + num * 3 * _LANES * 4,
    )

    sums = pl.pallas_call(
        kernel,
        out_shape=jax.ShapeDtypeStruct((num, 3, _LANES), jnp.float32),
        grid_spec=pltpu.PrefetchScalarGridSpec(
            num_scalar_prefetch=0,
            grid=(num, num_row_tiles),
            in_specs=[
                pl.BlockSpec((None, tile_rows, _LANES), lambda n, k: (n, k, 0)),
                pl.BlockSpec((None, tile_rows, _LANES), lambda n, k: (n, k, 0)),
            ],
            out_specs=pl.BlockSpec((None, 3, _LANES), lambda n, k: (n, 0, 0)),
            scratch_shapes=[
                pltpu.VMEM((1, _LANES), jnp.float32),  # sum(probs * targets)
                pltpu.VMEM((1, _LANES), jnp.float32),  # sum(probs)
                pltpu.VMEM((1, _LANES), jnp.float32),  # sum(targets)
            ],
        ),
        compiler_params=pltpu.CompilerParams(
            dimension_semantics=("parallel", "arbitrary"),
            vmem_limit_bytes=32 * 1024 * 1024,
        ),
        cost_estimate=cost,
    )(m1, m2)

    # Tiny final combine (N x 3 x 128) in plain JAX.
    inter = jnp.sum(sums[:, 0, :], axis=-1)
    s1 = jnp.sum(sums[:, 1, :], axis=-1)
    s2 = jnp.sum(sums[:, 2, :], axis=-1)
    score = 2.0 * (inter + smooth) / (s1 + s2 + smooth)
    return 1.0 - jnp.sum(score) / num


def soft_dice_loss_ref(logits, targets, smooth=1.0):
    """Pure-JAX reference mirroring the PyTorch forward."""
    num = logits.shape[0]
    probs = jax.nn.sigmoid(logits.astype(jnp.float32))
    m1 = probs.reshape(num, -1)
    m2 = targets.astype(jnp.float32).reshape(num, -1)
    inter = jnp.sum(m1 * m2, axis=1)
    score = 2.0 * (inter + smooth) / (jnp.sum(m1, axis=1) + jnp.sum(m2, axis=1) + smooth)
    return 1.0 - jnp.sum(score) / num


if __name__ == "__main__":
    key = jax.random.PRNGKey(0)
    k1, k2, k3, k4 = jax.random.split(key, 4)

    # 1) Float targets, matching the PyTorch module's typical usage.
    N, C, H, W = 2, 4, 16, 16
    logits = jax.random.normal(k1, (N, C, H, W), dtype=jnp.float32)
    targets = (jax.random.uniform(k2, (N, C, H, W)) > 0.5).astype(jnp.float32)

    loss = jax.block_until_ready(soft_dice_loss(logits, targets, smooth=1.0))
    ref = jax.block_until_ready(soft_dice_loss_ref(logits, targets, smooth=1.0))
    # Tolerance accounts for the EUP approximate-reciprocal sigmoid.
    assert jnp.allclose(loss, ref, atol=1e-3, rtol=1e-3), (loss, ref)

    # 2) Native int8 segmentation-mask targets (streamed without upcast in HBM).
    N2, C2, H2, W2 = 2, 4, 32, 32
    logits2 = jax.random.normal(k3, (N2, C2, H2, W2), dtype=jnp.float32)
    targets2 = (jax.random.uniform(k4, (N2, C2, H2, W2)) > 0.5).astype(jnp.int8)

    loss2 = jax.block_until_ready(soft_dice_loss(logits2, targets2, smooth=1.0))
    ref2 = jax.block_until_ready(soft_dice_loss_ref(logits2, targets2, smooth=1.0))
    assert jnp.allclose(loss2, ref2, atol=1e-3, rtol=1e-3), (loss2, ref2)

    print("KERNEL_OK")
</pallas_src>

<mosaic_0001>
module attributes {stable_mosaic.version = 11 : i64} {
  func.func @_soft_dice_sums_kernel(%arg0: i32, %arg1: i32, %arg2: memref<1x8x128xf32, #tpu.memory_space<vmem>>, %arg3: memref<1x8x128xf32, #tpu.memory_space<vmem>>, %arg4: memref<1x3x128xf32, #tpu.memory_space<vmem>>, %arg5: memref<1x128xf32, #tpu.memory_space<vmem>>, %arg6: memref<1x128xf32, #tpu.memory_space<vmem>>, %arg7: memref<1x128xf32, #tpu.memory_space<vmem>>) attributes {dimension_semantics = [#tpu.dimension_semantics<parallel>, #tpu.dimension_semantics<arbitrary>], iteration_bounds = array<i64: 2, 1>, scalar_prefetch = 0 : i64, scratch_operands = 3 : i64, tpu.core_type = #tpu.core_type<tc>, window_params = [{transform_indices = @transform_0, window_bounds = array<i64: 1, 8, 128>}, {transform_indices = @transform_1, window_bounds = array<i64: 1, 8, 128>}, {transform_indices = @transform_2, window_bounds = array<i64: 1, 3, 128>}]} {
    %c0_i32 = arith.constant 0 : i32
    %0 = arith.cmpi eq, %arg1, %c0_i32 : i32
    %1 = arith.extui %0 : i1 to i32
    %c0_i32_0 = arith.constant 0 : i32
    %2 = arith.cmpi ne, %1, %c0_i32_0 : i32
    scf.if %2 {
      %cst_24 = arith.constant 0.000000e+00 : f32
      %32 = vector.broadcast %cst_24 : f32 to vector<1x128xf32>
      %c0_25 = arith.constant 0 : index
      %c0_26 = arith.constant 0 : index
      %33 = vector.load %arg5[%c0_25, %c0_26] : memref<1x128xf32, #tpu.memory_space<vmem>>, vector<1x128xf32>
      tpu.vector_store %arg5[%c0_25, %c0_26], %32 {strides = array<i32>} : memref<1x128xf32, #tpu.memory_space<vmem>>, vector<1x128xf32>,
      %cst_27 = arith.constant 0.000000e+00 : f32
      %34 = vector.broadcast %cst_27 : f32 to vector<1x128xf32>
      %c0_28 = arith.constant 0 : index
      %c0_29 = arith.constant 0 : index
      %35 = vector.load %arg6[%c0_28, %c0_29] : memref<1x128xf32, #tpu.memory_space<vmem>>, vector<1x128xf32>
      tpu.vector_store %arg6[%c0_28, %c0_29], %34 {strides = array<i32>} : memref<1x128xf32, #tpu.memory_space<vmem>>, vector<1x128xf32>,
      %cst_30 = arith.constant 0.000000e+00 : f32
      %36 = vector.broadcast %cst_30 : f32 to vector<1x128xf32>
      %c0_31 = arith.constant 0 : index
      %c0_32 = arith.constant 0 : index
      %37 = vector.load %arg7[%c0_31, %c0_32] : memref<1x128xf32, #tpu.memory_space<vmem>>, vector<1x128xf32>
      tpu.vector_store %arg7[%c0_31, %c0_32], %36 {strides = array<i32>} : memref<1x128xf32, #tpu.memory_space<vmem>>, vector<1x128xf32>,
    } else {
    }
    %c0 = arith.constant 0 : index
    %c0_1 = arith.constant 0 : index
    %c0_2 = arith.constant 0 : index
    %3 = vector.load %arg2[%c0, %c0_1, %c0_2] : memref<1x8x128xf32, #tpu.memory_space<vmem>>, vector<1x8x128xf32>
    %4 = vector.shape_cast %3 : vector<1x8x128xf32> to vector<8x128xf32>
    %c0_3 = arith.constant 0 : index
    %c0_4 = arith.constant 0 : index
    %c0_5 = arith.constant 0 : index
    %5 = vector.load %arg3[%c0_3, %c0_4, %c0_5] : memref<1x8x128xf32, #tpu.memory_space<vmem>>, vector<1x8x128xf32>
    %6 = vector.shape_cast %5 : vector<1x8x128xf32> to vector<8x128xf32>
    %cst = arith.constant 0.000000e+00 : f32
    %7 = vector.broadcast %cst : f32 to vector<8x128xf32>
    %8 = arith.subf %7, %4 : vector<8x128xf32>
    %9 = math.exp %8 : vector<8x128xf32>
    %cst_6 = arith.constant 1.000000e+00 : f32
    %10 = vector.broadcast %cst_6 : f32 to vector<8x128xf32>
    %11 = arith.addf %10, %9 : vector<8x128xf32>
    %12 = tpu.reciprocal %11 {approx = true} : vector<8x128xf32> -> vector<8x128xf32>
    %c0_7 = arith.constant 0 : index
    %c0_8 = arith.constant 0 : index
    %13 = vector.load %arg5[%c0_7, %c0_8] : memref<1x128xf32, #tpu.memory_space<vmem>>, vector<1x128xf32>
    %14 = arith.mulf %12, %6 : vector<8x128xf32>
    %cst_9 = arith.constant dense<0.000000e+00> : vector<128xf32>
    %15 = vector.multi_reduction <add>, %14, %cst_9 [0] : vector<8x128xf32> to vector<128xf32>
    %16 = vector.shape_cast %15 : vector<128xf32> to vector<1x128xf32>
    %17 = arith.addf %13, %16 : vector<1x128xf32>
    %c0_10 = arith.constant 0 : index
    %c0_11 = arith.constant 0 : index
    %18 = vector.load %arg5[%c0_10, %c0_11] : memref<1x128xf32, #tpu.memory_space<vmem>>, vector<1x128xf32>
    tpu.vector_store %arg5[%c0_10, %c0_11], %17 {strides = array<i32>} : memref<1x128xf32, #tpu.memory_space<vmem>>, vector<1x128xf32>,
    %c0_12 = arith.constant 0 : index
    %c0_13 = arith.constant 0 : index
    %19 = vector.load %arg6[%c0_12, %c0_13] : memref<1x128xf32, #tpu.memory_space<vmem>>, vector<1x128xf32>
    %cst_14 = arith.constant dense<0.000000e+00> : vector<128xf32>
    %20 = vector.multi_reduction <add>, %12, %cst_14 [0] : vector<8x128xf32> to vector<128xf32>
    %21 = vector.shape_cast %20 : vector<128xf32> to vector<1x128xf32>
    %22 = arith.addf %19, %21 : vector<1x128xf32>
    %c0_15 = arith.constant 0 : index
    %c0_16 = arith.constant 0 : index
    %23 = vector.load %arg6[%c0_15, %c0_16] : memref<1x128xf32, #tpu.memory_space<vmem>>, vector<1x128xf32>
    tpu.vector_store %arg6[%c0_15, %c0_16], %22 {strides = array<i32>} : memref<1x128xf32, #tpu.memory_space<vmem>>, vector<1x128xf32>,
    %c0_17 = arith.constant 0 : index
    %c0_18 = arith.constant 0 : index
    %24 = vector.load %arg7[%c0_17, %c0_18] : memref<1x128xf32, #tpu.memory_space<vmem>>, vector<1x128xf32>
    %cst_19 = arith.constant dense<0.000000e+00> : vector<128xf32>
    %25 = vector.multi_reduction <add>, %6, %cst_19 [0] : vector<8x128xf32> to vector<128xf32>
    %26 = vector.shape_cast %25 : vector<128xf32> to vector<1x128xf32>
    %27 = arith.addf %24, %26 : vector<1x128xf32>
    %c0_20 = arith.constant 0 : index
    %c0_21 = arith.constant 0 : index
    %28 = vector.load %arg7[%c0_20, %c0_21] : memref<1x128xf32, #tpu.memory_space<vmem>>, vector<1x128xf32>
    tpu.vector_store %arg7[%c0_20, %c0_21], %27 {strides = array<i32>} : memref<1x128xf32, #tpu.memory_space<vmem>>, vector<1x128xf32>,
    %c0_i32_22 = arith.constant 0 : i32
    %29 = arith.cmpi eq, %arg1, %c0_i32_22 : i32
    %30 = arith.extui %29 : i1 to i32
    %c0_i32_23 = arith.constant 0 : i32
    %31 = arith.cmpi ne, %30, %c0_i32_23 : i32
    scf.if %31 {
      %c0_24 = arith.constant 0 : index
      %c0_25 = arith.constant 0 : index
      %32 = vector.load %arg5[%c0_24, %c0_25] : memref<1x128xf32, #tpu.memory_space<vmem>>, vector<1x128xf32>
      %c0_26 = arith.constant 0 : index
      %c0_27 = arith.constant 0 : index
      %c0_28 = arith.constant 0 : index
      %33 = vector.load %arg4[%c0_26, %c0_27, %c0_28] : memref<1x3x128xf32, #tpu.memory_space<vmem>>, vector<1x1x128xf32>
      %34 = vector.shape_cast %33 : vector<1x1x128xf32> to vector<1x128xf32>
      %35 = vector.shape_cast %32 : vector<1x128xf32> to vector<1x1x128xf32>
      tpu.vector_store %arg4[%c0_26, %c0_27, %c0_28], %35 {strides = array<i32>} : memref<1x3x128xf32, #tpu.memory_space<vmem>>, vector<1x1x128xf32>,
      %c0_29 = arith.constant 0 : index
      %c0_30 = arith.constant 0 : index
      %36 = vector.load %arg6[%c0_29, %c0_30] : memref<1x128xf32, #tpu.memory_space<vmem>>, vector<1x128xf32>
      %c0_31 = arith.constant 0 : index
      %c1 = arith.constant 1 : index
      %c0_32 = arith.constant 0 : index
      %37 = vector.load %arg4[%c0_31, %c1, %c0_32] : memref<1x3x128xf32, #tpu.memory_space<vmem>>, vector<1x1x128xf32>
      %38 = vector.shape_cast %37 : vector<1x1x128xf32> to vector<1x128xf32>
      %39 = vector.shape_cast %36 : vector<1x128xf32> to vector<1x1x128xf32>
      tpu.vector_store %arg4[%c0_31, %c1, %c0_32], %39 {strides = array<i32>} : memref<1x3x128xf32, #tpu.memory_space<vmem>>, vector<1x1x128xf32>,
      %c0_33 = arith.constant 0 : index
      %c0_34 = arith.constant 0 : index
      %40 = vector.load %arg7[%c0_33, %c0_34] : memref<1x128xf32, #tpu.memory_space<vmem>>, vector<1x128xf32>
      %c0_35 = arith.constant 0 : index
      %c2 = arith.constant 2 : index
      %c0_36 = arith.constant 0 : index
      %41 = vector.load %arg4[%c0_35, %c2, %c0_36] : memref<1x3x128xf32, #tpu.memory_space<vmem>>, vector<1x1x128xf32>
      %42 = vector.shape_cast %41 : vector<1x1x128xf32> to vector<1x128xf32>
      %43 = vector.shape_cast %40 : vector<1x128xf32> to vector<1x1x128xf32>
      tpu.vector_store %arg4[%c0_35, %c2, %c0_36], %43 {strides = array<i32>} : memref<1x3x128xf32, #tpu.memory_space<vmem>>, vector<1x1x128xf32>,
    } else {
    }
    return
  }
  func.func @transform_0(%arg0: i32, %arg1: i32) -> (i32, i32, i32) {
    %c0_i32 = arith.constant 0 : i32
    %c0_i32_0 = arith.constant 0 : i32
    return %arg0, %arg1, %c0_i32 : i32, i32, i32
  }
  func.func @transform_1(%arg0: i32, %arg1: i32) -> (i32, i32, i32) {
    %c0_i32 = arith.constant 0 : i32
    %c0_i32_0 = arith.constant 0 : i32
    return %arg0, %arg1, %c0_i32 : i32, i32, i32
  }
  func.func @transform_2(%arg0: i32, %arg1: i32) -> (i32, i32, i32) {
    %c0_i32 = arith.constant 0 : i32
    %c0_i32_0 = arith.constant 0 : i32
    %c0_i32_1 = arith.constant 0 : i32
    return %arg0, %c0_i32, %c0_i32_0 : i32, i32, i32
  }
}

</mosaic_0001>

<llo_original>
// kernel: tpu_custom_call.1
$region0: #{tpu_custom_call.1}
  #allocation0 [shape = 'u32[]', space=smem, size = 0x4, offset = 0x4, fixed_abs, tag = 'smem constant byte address 0x4 - core index']
  #allocation1 [shape = 'u32[72,128]{1,0:T(1,128)}', space=vmem, size = 0x9000, scoped, tag = 'internal scratch']
  #allocation2 [shape = 'f32[1,128]{1,0:T(1,128)}', space=vmem, size = 0x200, scoped, tag = 'scratch operand']
  #allocation3 [shape = 'f32[1,128]{1,0:T(1,128)}', space=vmem, size = 0x200, scoped, tag = 'scratch operand']
  #allocation4 [shape = 'f32[1,128]{1,0:T(1,128)}', space=vmem, size = 0x200, scoped, tag = 'scratch operand']
  %s0 = inlined_call_operand.hbm [shape: f32[2,8,128], index: 0, kind: input, shape index: {}]
  %s1 = inlined_call_operand.hbm [shape: f32[2,8,128], index: 1, kind: input, shape index: {}]
  %s2 = inlined_call_operand.vmem [shape: f32[2,3,128], index: 2, kind: output, shape index: {}]
  %s3 = sld [smem:[#allocation0]]
  $region57: #{tpu_custom_call.1} parent=0
    _
  %s5 = ssub.s32 1, %s3
  %s6 = scalar_select 0, %s5, %s3
  $region1: #{tpu_custom_call.1} parent=0
    #allocation5 [shape = 'u8[8192]{0}', space=vmem, size = 0x2000, scoped, tag = 'input window, operand 0']
    #allocation6 [shape = 's32[2]{0}', space=sflag, size = 0x8, scoped, tag = 'scoped memory for tpu_custom_call.1']
    #allocation7 [shape = 'u8[8192]{0}', space=vmem, size = 0x2000, scoped, tag = 'input window, operand 1']
    #allocation8 [shape = 's32[2]{0}', space=sflag, size = 0x8, scoped, tag = 'scoped memory for tpu_custom_call.1']
    %7 = vsyncpa [#allocation6], 0
    %s8 = scalar_lea.sflag [#allocation6], 1
    %9 = vsyncpa %s8, 0
    %10 = vsyncpa [#allocation8], 0
    %s11 = scalar_lea.sflag [#allocation8], 1
    %12 = vsyncpa %s11, 0
    loop: start=0, step=1, limit=4
    $region2: #{tpu_custom_call.1} parent=1 // loop_pre_header
      _
    $region3: #{tpu_custom_call.1} parent=1 // loop_header
      %s14 = sphi 0, %s18
      %p15 = scmp.ge.s32.totalorder %s14, 4
      %s21 = sphi 0, %s33
      %s22 = sphi 0, %s29
      %s23 = sphi 0, %s21
      %s24 = sphi 0, %s22
      %s25 = sphi 0, %s23
      %s26 = sphi 0, %s24
      %s38 = sphi 0, %s40
      %s41 = sphi 0, %s38
      %s42 = sphi 0, %s41
      %s58 = sphi 0, %s42
      %s66 = sphi 0, %s68
      %s69 = sphi 0, %s66
      %s70 = sphi 0, %s69
      %s86 = sphi 0, %s70
      %s92 = sphi 0, %s94
      %s95 = sphi 0, %s92
      %s96 = sphi 0, %s95
      %s112 = sphi 0, %s96
    $region4: #{tpu_custom_call.1} parent=1 // loop_header_branch
      %17 = sbr.rel (%p15) target = $region8
    $region5: #{tpu_custom_call.1} parent=1 // loop_body
      %s19 = ssub.s32 %s14, 1
      %s20 = ssub.s32 %s14, 2
      %s27 = sadd.s32 1, %s22
      %p28 = scmp.ge.s32.totalorder %s27, 1
      %s29 = scalar_select %p28, 0, %s27
      %s30 = sadd.s32 1, %s21
      %s31 = scalar_select %p28, %s30, %s21
      %p32 = scmp.ge.s32.totalorder %s31, 2
      %s33 = scalar_select %p32, 0, %s31
      %s34 = ssub.s32 %s21, %s33
      %s35 = ssub.s32 %s22, %s29
      %s36 = sor.u32 %s34, %s35
      %p37 = scmp.eq.s32.totalorder %s36, 0
      %s39 = sadd.s32 %s38, 1
      %s40 = scalar_select %p37, %s38, %s39
      %p43 = pneg %p37
      %p44 = scmp.eq.s32.totalorder %s14, 1
      %p45 = por %p43, %p44
      %p46 = scmp.ne.s32.totalorder %s38, %s41
      %p47 = scmp.eq.s32.totalorder %s14, 0
      %p48 = por %p46, %p47
      %p49 = scmp.ne.s32.totalorder %s38, %s41
      %p50 = scmp.eq.s32.totalorder %s19, 1
      %p51 = por %p49, %p50
      %p52 = scmp.ne.s32.totalorder %s41, %s42
      %p53 = scmp.eq.s32.totalorder %s19, 0
      %p54 = por %p52, %p53
      %p55 = scmp.ne.s32.totalorder %s41, %s42
      %p56 = scmp.eq.s32.totalorder %s20, 1
      %p57 = por %p55, %p56
      %p59 = scmp.ne.s32.totalorder %s42, %s58
      %p60 = scmp.eq.s32.totalorder %s20, 0
      %p61 = por %p59, %p60
      %s62 = ssub.s32 %s21, %s33
      %s63 = ssub.s32 %s22, %s29
      %s64 = sor.u32 %s62, %s63
      %p65 = scmp.eq.s32.totalorder %s64, 0
      %s67 = sadd.s32 %s66, 1
      %s68 = scalar_select %p65, %s66, %s67
      %p71 = pneg %p65
      %p72 = scmp.eq.s32.totalorder %s14, 1
      %p73 = por %p71, %p72
      %p74 = scmp.ne.s32.totalorder %s66, %s69
      %p75 = scmp.eq.s32.totalorder %s14, 0
      %p76 = por %p74, %p75
      %p77 = scmp.ne.s32.totalorder %s66, %s69
      %p78 = scmp.eq.s32.totalorder %s19, 1
      %p79 = por %p77, %p78
      %p80 = scmp.ne.s32.totalorder %s69, %s70
      %p81 = scmp.eq.s32.totalorder %s19, 0
      %p82 = por %p80, %p81
      %p83 = scmp.ne.s32.totalorder %s69, %s70
      %p84 = scmp.eq.s32.totalorder %s20, 1
      %p85 = por %p83, %p84
      %p87 = scmp.ne.s32.totalorder %s70, %s86
      %p88 = scmp.eq.s32.totalorder %s20, 0
      %p89 = por %p87, %p88
      %s90 = ssub.s32 %s21, %s33
      %p91 = scmp.eq.s32.totalorder %s90, 0
      %s93 = sadd.s32 %s92, 1
      %s94 = scalar_select %p91, %s92, %s93
      %p97 = pneg %p91
      %p98 = scmp.eq.s32.totalorder %s14, 1
      %p99 = por %p97, %p98
      %p100 = scmp.ne.s32.totalorder %s92, %s95
      %p101 = scmp.eq.s32.totalorder %s14, 0
      %p102 = por %p100, %p101
      %p103 = scmp.ne.s32.totalorder %s92, %s95
      %p104 = scmp.eq.s32.totalorder %s19, 1
      %p105 = por %p103, %p104
      %p106 = scmp.ne.s32.totalorder %s95, %s96
      %p107 = scmp.eq.s32.totalorder %s19, 0
      %p108 = por %p106, %p107
      %p109 = scmp.ne.s32.totalorder %s95, %s96
      %p110 = scmp.eq.s32.totalorder %s20, 1
      %p111 = por %p109, %p110
      %p113 = scmp.ne.s32.totalorder %s96, %s112
      %p114 = scmp.eq.s32.totalorder %s20, 0
      %p115 = por %p113, %p114
      %p116 = scmp.le.s32.totalorder 1, %s14
      %p117 = scmp.lt.s32.totalorder %s14, 3
      %p118 = pnand %p116, %p117
      %p119 = pneg %p118
      // Predicated region
      $region9: #{tpu_custom_call.1} parent=5 // pred_check
        _
      $region10: #{tpu_custom_call.1} parent=5 // pred_check_branch
        %121 = sbr.rel (%p118) target = $region12
      $region11: #{tpu_custom_call.1} parent=5 // pred_region
        %s122 = ssub.s32 %s14, 1
      $region12: #{tpu_custom_call.1} parent=5 // pred_fallthru
        _
      %p123 = scmp.lt.s32.totalorder %s14, 2
      // Predicated region
      $region13: #{tpu_custom_call.1} parent=5 // pred_check
        %p124 = pneg %p123
      $region14: #{tpu_custom_call.1} parent=5 // pred_check_branch
        %126 = sbr.rel (%p124) target = $region16
      $region15: #{tpu_custom_call.1} parent=5 // pred_region
        // Predicated region
        $region17: #{tpu_custom_call.1} parent=15 // pred_check
          %p127 = pneg %p48
        $region18: #{tpu_custom_call.1} parent=15 // pred_check_branch
          %129 = sbr.rel (%p127) target = $region20
        $region19: #{tpu_custom_call.1} parent=15 // pred_region
          %s130 = sand.u32 %s38, 1
          %s131 = scalar_lea.sflag [#allocation6], %s130
          %s132 = sand.u32 %s38, 1
          %s133 = smul.addr %s132, 8
          %s134 = scalar_lea.vmem [#allocation5], %s133
          %136 = vsyncadd %s131, 0
          %s137 = sadd.s32 %s22, %s21
          %s138 = smul.addr %s137, 8
          %s139 = scalar_lea.hbm %s0, %s138
          %s141 = sshll.u32 %s139, 4
          %s142 = int_to_ptr.hbm [resolvable:$true] %s141
          %s143 = sshll.u32 %s134, 4
          %s144 = int_to_ptr.vmem [resolvable:$true] %s143
          %146 = dma.hbm_to_vmem [thread:$0]  %s142, 128, %s144, %s131
        $region20: #{tpu_custom_call.1} parent=15 // pred_fallthru
          _
        // Predicated region
        $region21: #{tpu_custom_call.1} parent=15 // pred_check
          %p147 = pneg %p76
        $region22: #{tpu_custom_call.1} parent=15 // pred_check_branch
          %149 = sbr.rel (%p147) target = $region24
        $region23: #{tpu_custom_call.1} parent=15 // pred_region
          %s150 = sand.u32 %s66, 1
          %s151 = scalar_lea.sflag [#allocation8], %s150
          %s152 = sand.u32 %s66, 1
          %s153 = smul.addr %s152, 8
          %s154 = scalar_lea.vmem [#allocation7], %s153
          %156 = vsyncadd %s151, 0
          %s157 = sadd.s32 %s22, %s21
          %s158 = smul.addr %s157, 8
          %s159 = scalar_lea.hbm %s1, %s158
          %s161 = sshll.u32 %s159, 4
          %s162 = int_to_ptr.hbm [resolvable:$true] %s161
          %s163 = sshll.u32 %s154, 4
          %s164 = int_to_ptr.vmem [resolvable:$true] %s163
          %166 = dma.hbm_to_vmem [thread:$0]  %s162, 128, %s164, %s151
        $region24: #{tpu_custom_call.1} parent=15 // pred_fallthru
          _
      $region16: #{tpu_custom_call.1} parent=5 // pred_fallthru
        _
      %p167 = scmp.le.s32.totalorder 1, %s14
      %p168 = scmp.lt.s32.totalorder %s14, 3
      %p169 = pnand %p167, %p168
      %p170 = pneg %p169
      // Predicated region
      $region25: #{tpu_custom_call.1} parent=5 // pred_check
        _
      $region26: #{tpu_custom_call.1} parent=5 // pred_check_branch
        %172 = sbr.rel (%p169) target = $region28
      $region27: #{tpu_custom_call.1} parent=5 // pred_region
        %s173 = ssub.s32 %s14, 1
        %s174 = sand.u32 %s41, 1
        %s175 = scalar_lea.sflag [#allocation6], %s174
        %s176 = sand.u32 %s41, 1
        %s177 = smul.addr %s176, 8
        %s178 = scalar_lea.vmem [#allocation5], %s177
        // Predicated region
        $region29: #{tpu_custom_call.1} parent=27 // pred_check
          %p179 = pneg %p54
        $region30: #{tpu_custom_call.1} parent=27 // pred_check_branch
          %181 = sbr.rel (%p179) target = $region32
        $region31: #{tpu_custom_call.1} parent=27 // pred_region
          %183 = dma.done %s175, 128
        $region32: #{tpu_custom_call.1} parent=27 // pred_fallthru
          _
        %s184 = sand.u32 %s69, 1
        %s185 = scalar_lea.sflag [#allocation8], %s184
        %s186 = sand.u32 %s69, 1
        %s187 = smul.addr %s186, 8
        %s188 = scalar_lea.vmem [#allocation7], %s187
        // Predicated region
        $region33: #{tpu_custom_call.1} parent=27 // pred_check
          %p189 = pneg %p82
        $region34: #{tpu_custom_call.1} parent=27 // pred_check_branch
          %191 = sbr.rel (%p189) target = $region36
        $region35: #{tpu_custom_call.1} parent=27 // pred_region
          %193 = dma.done %s185, 128
        $region36: #{tpu_custom_call.1} parent=27 // pred_fallthru
          _
        %s194 = sand.u32 %s41, 1
        %s195 = scalar_lea.sflag [#allocation6], %s194
        %s196 = sand.u32 %s41, 1
        %s197 = smul.addr %s196, 8
        %s198 = scalar_lea.vmem [#allocation5], %s197
        %p199 = pneg %p54
        %p200 = pneg %p51
        %s201 = sand.u32 %s69, 1
        %s202 = scalar_lea.sflag [#allocation8], %s201
        %s203 = sand.u32 %s69, 1
        %s204 = smul.addr %s203, 8
        %s205 = scalar_lea.vmem [#allocation7], %s204
        %p206 = pneg %p82
        %p207 = pneg %p79
        %p208 = pneg %p108
        %p209 = pneg %p105
        %p210 = scmp.lt.s32.totalorder %s23, 1
        %s211 = scalar_select %p210, %s23, 1
        %s212 = smul.addr %s211, 4
        %s213 = scalar_lea.vmem %s2, %s212
        %p214 = scmp.lt.s32.totalorder %s23, 1
        %s215 = scalar_select %p214, %s23, 1
        %s216 = smul.addr %s215, 4
        %s217 = scalar_lea.vmem %s2, %s216
        %p218 = scmp.eq.s32.totalorder %s24, 0
        // Predicated region
        $region37: #{tpu_custom_call.1} parent=27 // pred_check
          %p219 = pneg %p218
        $region38: #{tpu_custom_call.1} parent=27 // pred_check_branch
          %221 = sbr.rel (%p219) target = $region40
        $region39: #{tpu_custom_call.1} parent=27 // pred_region
          %222 = vst [vmem:[#allocation2] sm:$0x1] 0.0
          %223 = vst [vmem:[#allocation3] sm:$0x1] 0.0
          %224 = vst [vmem:[#allocation4] sm:$0x1] 0.0
        $region40: #{tpu_custom_call.1} parent=27 // pred_fallthru
          _
        %v225 = vld [vmem:[%s178] sm:$0xff]
        %v226 = vld [vmem:[%s188] sm:$0xff]
        %v227 = vsub.f32 0.0, %v225
        %v228 = vmul.f32 %v227, 1.442695
        %v229 = vpow.pop %v228
        %v230 = vadd.f32 %v229, 1.0
        %v231 = vrcp.pop %v230
        %v232 = vld [vmem:[#allocation2] sm:$0x1]
        %v233 = vmul.f32 %v231, %v226
        %v234 = vrot.slane %v233, 4
        %v235 = vadd.f32 %v233, %v234
        %v236 = vrot.slane %v235, 2
        %v237 = vadd.f32 %v235, %v236
        %v238 = vrot.slane %v237, 1
        %v239 = vadd.f32 %v237, %v238
        %v240 = vadd.f32 %v232, %v239
        %241 = vst [vmem:[#allocation2] sm:$0x1] %v240
        %v242 = vld [vmem:[#allocation3] sm:$0x1]
        %v243 = vrot.slane %v231, 4
        %v244 = vadd.f32 %v231, %v243
        %v245 = vrot.slane %v244, 2
        %v246 = vadd.f32 %v244, %v245
        %v247 = vrot.slane %v246, 1
        %v248 = vadd.f32 %v246, %v247
        %v249 = vadd.f32 %v242, %v248
        %250 = vst [vmem:[#allocation3] sm:$0x1] %v249
        %v251 = vld [vmem:[#allocation4] sm:$0x1]
        %v252 = vrot.slane %v226, 4
        %v253 = vadd.f32 %v226, %v252
        %v254 = vrot.slane %v253, 2
        %v255 = vadd.f32 %v253, %v254
        %v256 = vrot.slane %v255, 1
        %v257 = vadd.f32 %v255, %v256
        %v258 = vadd.f32 %v251, %v257
        %259 = vst [vmem:[#allocation4] sm:$0x1] %v258
        // Predicated region
        $region41: #{tpu_custom_call.1} parent=27 // pred_check
          %p260 = pneg %p218
        $region42: #{tpu_custom_call.1} parent=27 // pred_check_branch
          %262 = sbr.rel (%p260) target = $region44
        $region43: #{tpu_custom_call.1} parent=27 // pred_region
          %v263 = vld [vmem:[#allocation2] sm:$0x1]
          %264 = vst [vmem:[%s217] sm:$0x1] %v263
          %v265 = vld [vmem:[#allocation3] sm:$0x1]
          %266 = vst [vmem:[%s217 + $0x1] sm:$0x1] %v265
          %v267 = vld [vmem:[#allocation4] sm:$0x1]
          %268 = vst [vmem:[%s217 + $0x2] sm:$0x1] %v267
        $region44: #{tpu_custom_call.1} parent=27 // pred_fallthru
          _
        %p269 = scmp.lt.s32.totalorder %s23, 1
        %s270 = scalar_select %p269, %s23, 1
        %s271 = smul.addr %s270, 4
        %s272 = scalar_lea.vmem %s2, %s271
        // Predicated region
        $region45: #{tpu_custom_call.1} parent=27 // pred_check
          %p273 = pneg %p105
        $region46: #{tpu_custom_call.1} parent=27 // pred_check_branch
          %275 = sbr.rel (%p273) target = $region48
        $region47: #{tpu_custom_call.1} parent=27 // pred_region
          _
        $region48: #{tpu_custom_call.1} parent=27 // pred_fallthru
          _
      $region28: #{tpu_custom_call.1} parent=5 // pred_fallthru
        _
      %p276 = scmp.le.s32.totalorder 2, %s14
      // Predicated region
      $region49: #{tpu_custom_call.1} parent=5 // pred_check
        %p277 = pneg %p276
      $region50: #{tpu_custom_call.1} parent=5 // pred_check_branch
        %279 = sbr.rel (%p277) target = $region52
      $region51: #{tpu_custom_call.1} parent=5 // pred_region
        %s280 = ssub.s32 %s14, 2
        // Predicated region
        $region53: #{tpu_custom_call.1} parent=51 // pred_check
          %p281 = pneg %p111
        $region54: #{tpu_custom_call.1} parent=51 // pred_check_branch
          %283 = sbr.rel (%p281) target = $region56
        $region55: #{tpu_custom_call.1} parent=51 // pred_region
          %p284 = scmp.lt.s32.totalorder %s25, 1
          %s285 = scalar_select %p284, %s25, 1
          %s286 = smul.addr %s285, 4
          %s287 = scalar_lea.vmem %s2, %s286
        $region56: #{tpu_custom_call.1} parent=51 // pred_fallthru
          _
      $region52: #{tpu_custom_call.1} parent=5 // pred_fallthru
        _
    $region6: #{tpu_custom_call.1} parent=1 // loop_footer
      %s18 = sadd.s32 1, %s14
    $region7: #{tpu_custom_call.1} parent=1 // loop_footer_branch
      %13 = sbr.rel target = $region3
    $region8: #{tpu_custom_call.1} parent=1 // loop_exit
      _
    %288 = vsyncpa [#allocation6], 1
    %s289 = scalar_lea.sflag [#allocation6], 1
    %290 = vsyncpa %s289, 1
    %291 = vsyncpa [#allocation8], 1
    %s292 = scalar_lea.sflag [#allocation8], 1
    %293 = vsyncpa %s292, 1

</llo_original>
